<compile_context>
chip_gen: v7x
topology: tpu7x:2x2x1
jax: 0.10.0
libtpu: 0.0.40
codegen_flags: <defaults>
</compile_context>

<pallas_src>
import jax
import jax.numpy as jnp
from jax.experimental import pallas as pl
from jax.experimental.pallas import tpu as pltpu


def external_attention_kernel(x_ref, wk_ref, wv_ref, o_ref):
    # x_ref: (block_b, N, D)  wk_ref: (D, S)  wv_ref: (S, D)  o_ref: (block_b, N, D)
    block_b, n, d = x_ref.shape
    s = wk_ref.shape[1]

    # ---- logits = x @ Wk, with batch folded into the MXU M dimension ----
    x2 = x_ref[...].reshape(block_b * n, d).astype(jnp.bfloat16)
    wk = wk_ref[...].astype(jnp.bfloat16)
    logits = jnp.dot(x2, wk, preferred_element_type=jnp.float32)   # (block_b*N, S) f32
    logits = logits.reshape(block_b, n, s)

    # ---- softmax over the token axis (PyTorch dim=1), all math in f32 ----
    m = jnp.max(logits, axis=1, keepdims=True)         # (block_b, 1, S)
    e = jnp.exp(logits - m)                            # (block_b, N, S)
    denom = jnp.sum(e, axis=1, keepdims=True)          # (block_b, 1, S)
    # The PyTorch module's `attn / attn.sum(dim=1)` divides by a value that is
    # identically 1 after this softmax, so a single reciprocal of the exp-sum
    # implements both steps. approx=True runs on the EUP slot, off the VALU.
    inv = pl.reciprocal(denom, approx=True)
    attn = e * inv                                     # (block_b, N, S)

    # ---- out = attn @ Wv ----
    attn2 = attn.reshape(block_b * n, s).astype(jnp.bfloat16)
    wv = wv_ref[...].astype(jnp.bfloat16)
    out = jnp.dot(attn2, wv, preferred_element_type=jnp.float32)   # (block_b*N, D)
    o_ref[...] = out.reshape(block_b, n, d).astype(o_ref.dtype)


def external_attention(queries, wk, wv, *, block_b=None):
    """queries: (B, N, D); wk: (D, S) = mk.weight.T; wv: (S, D) = mv.weight.T."""
    B, N, D = queries.shape
    S = wk.shape[1]

    if block_b is None:
        # Fold enough batch elements per grid step to give the MXU >=128 rows,
        # but keep >=2 grid steps when possible (both v7x TensorCores busy).
        block_b = max(1, min(max(B // 2, 1), pl.cdiv(128, N)))
    block_b = max(1, min(block_b, B))
    while B % block_b:          # simple even split for the demo
        block_b -= 1
    grid = (B // block_b,)

    return pl.pallas_call(
        external_attention_kernel,
        out_shape=jax.ShapeDtypeStruct((B, N, D), queries.dtype),
        grid_spec=pltpu.PrefetchScalarGridSpec(
            num_scalar_prefetch=0,
            grid=grid,
            in_specs=[
                pl.BlockSpec((block_b, N, D), lambda b: (b, 0, 0)),
                # Constant index maps: weights are DMA'd once and stay resident.
                pl.BlockSpec((D, S), lambda b: (0, 0)),
                pl.BlockSpec((S, D), lambda b: (0, 0)),
            ],
            out_specs=pl.BlockSpec((block_b, N, D), lambda b: (b, 0, 0)),
        ),
        compiler_params=pltpu.CompilerParams(
            dimension_semantics=("parallel",),
        ),
    )(queries, wk, wv)


def external_attention_ref(queries, wk, wv):
    # Mirrors the PyTorch module exactly (including the redundant renorm).
    attn = jnp.einsum("bnd,ds->bns", queries, wk)
    attn = jax.nn.softmax(attn, axis=1)
    attn = attn / jnp.sum(attn, axis=1, keepdims=True)
    return jnp.einsum("bns,sd->bnd", attn, wv)


if __name__ == "__main__":
    # Small but lane-friendly shapes: d_model, S multiples of 128; N multiple of 8.
    # N != S so a wrong softmax axis would be clearly detected by the check.
    d_model, S = 128, 128
    B, N = 4, 64

    key = jax.random.PRNGKey(0)
    k_x, k_mk, k_mv = jax.random.split(key, 3)

    # torch Linear weights: mk.weight (S, d_model), mv.weight (d_model, S),
    # init.normal_(std=0.001), bias=False.
    mk_weight = 0.001 * jax.random.normal(k_mk, (S, d_model), dtype=jnp.float32)
    mv_weight = 0.001 * jax.random.normal(k_mv, (d_model, S), dtype=jnp.float32)
    wk = mk_weight.T            # (d_model, S)
    wv = mv_weight.T            # (S, d_model)

    queries = jax.random.normal(k_x, (B, N, d_model), dtype=jnp.float32)

    out = jax.block_until_ready(external_attention(queries, wk, wv))
    ref = external_attention_ref(queries, wk, wv)

    assert out.shape == (B, N, d_model)
    # bf16 MXU operands -> ~0.5% relative error on outputs of magnitude ~1e-4.
    assert jnp.allclose(out, ref, rtol=5e-2, atol=1e-5), float(
        jnp.max(jnp.abs(out - ref)))

    print("KERNEL_OK")
</pallas_src>

<mosaic_0001>
module attributes {stable_mosaic.version = 11 : i64} {
  func.func @external_attention_kernel(%arg0: i32, %arg1: memref<2x64x128xf32, #tpu.memory_space<vmem>>, %arg2: memref<128x128xf32, #tpu.memory_space<vmem>>, %arg3: memref<128x128xf32, #tpu.memory_space<vmem>>, %arg4: memref<2x64x128xf32, #tpu.memory_space<vmem>>) attributes {dimension_semantics = [#tpu.dimension_semantics<parallel>], iteration_bounds = array<i64: 2>, scalar_prefetch = 0 : i64, scratch_operands = 0 : i64, tpu.core_type = #tpu.core_type<tc>, window_params = [{transform_indices = @transform_0, window_bounds = array<i64: 2, 64, 128>}, {pipeline_mode = #tpu.pipeline_mode<synchronous>, transform_indices = @transform_1, window_bounds = array<i64: 128, 128>}, {pipeline_mode = #tpu.pipeline_mode<synchronous>, transform_indices = @transform_2, window_bounds = array<i64: 128, 128>}, {transform_indices = @transform_3, window_bounds = array<i64: 2, 64, 128>}]} {
    %c0 = arith.constant 0 : index
    %c0_0 = arith.constant 0 : index
    %c0_1 = arith.constant 0 : index
    %0 = vector.load %arg1[%c0, %c0_0, %c0_1] : memref<2x64x128xf32, #tpu.memory_space<vmem>>, vector<2x64x128xf32>
    %1 = vector.shape_cast %0 : vector<2x64x128xf32> to vector<128x128xf32>
    %2 = arith.truncf %1 : vector<128x128xf32> to vector<128x128xbf16>
    %c0_2 = arith.constant 0 : index
    %c0_3 = arith.constant 0 : index
    %3 = vector.load %arg2[%c0_2, %c0_3] : memref<128x128xf32, #tpu.memory_space<vmem>>, vector<128x128xf32>
    %4 = arith.truncf %3 : vector<128x128xf32> to vector<128x128xbf16>
    %cst = arith.constant dense<0.000000e+00> : vector<128x128xf32>
    %5 = tpu.matmul %2, %4, %cst {dimension_numbers = #tpu.dot_dimension_numbers<[1], [0], [0], [1], [0, 0, 1, 1], [], []>} : vector<128x128xbf16>, vector<128x128xbf16>, vector<128x128xf32> -> vector<128x128xf32>
    %6 = vector.shape_cast %5 : vector<128x128xf32> to vector<2x64x128xf32>
    %cst_4 = arith.constant dense<0xFF800000> : vector<2x128xf32>
    %7 = vector.multi_reduction <maximumf>, %6, %cst_4 [1] : vector<2x64x128xf32> to vector<2x128xf32>
    %8 = vector.shape_cast %7 : vector<2x128xf32> to vector<2x1x128xf32>
    %9 = vector.broadcast %8 : vector<2x1x128xf32> to vector<2x64x128xf32>
    %10 = arith.subf %6, %9 : vector<2x64x128xf32>
    %11 = math.exp %10 : vector<2x64x128xf32>
    %cst_5 = arith.constant dense<0.000000e+00> : vector<2x128xf32>
    %12 = vector.multi_reduction <add>, %11, %cst_5 [1] : vector<2x64x128xf32> to vector<2x128xf32>
    %13 = vector.shape_cast %12 : vector<2x128xf32> to vector<2x1x128xf32>
    %14 = tpu.reciprocal %13 {approx = true} : vector<2x1x128xf32> -> vector<2x1x128xf32>
    %15 = vector.broadcast %14 : vector<2x1x128xf32> to vector<2x64x128xf32>
    %16 = arith.mulf %11, %15 : vector<2x64x128xf32>
    %17 = vector.shape_cast %16 : vector<2x64x128xf32> to vector<128x128xf32>
    %18 = arith.truncf %17 : vector<128x128xf32> to vector<128x128xbf16>
    %c0_6 = arith.constant 0 : index
    %c0_7 = arith.constant 0 : index
    %19 = vector.load %arg3[%c0_6, %c0_7] : memref<128x128xf32, #tpu.memory_space<vmem>>, vector<128x128xf32>
    %20 = arith.truncf %19 : vector<128x128xf32> to vector<128x128xbf16>
    %cst_8 = arith.constant dense<0.000000e+00> : vector<128x128xf32>
    %21 = tpu.matmul %18, %20, %cst_8 {dimension_numbers = #tpu.dot_dimension_numbers<[1], [0], [0], [1], [0, 0, 1, 1], [], []>} : vector<128x128xbf16>, vector<128x128xbf16>, vector<128x128xf32> -> vector<128x128xf32>
    %22 = vector.shape_cast %21 : vector<128x128xf32> to vector<2x64x128xf32>
    %c0_9 = arith.constant 0 : index
    %c0_10 = arith.constant 0 : index
    %c0_11 = arith.constant 0 : index
    %23 = vector.load %arg4[%c0_9, %c0_10, %c0_11] : memref<2x64x128xf32, #tpu.memory_space<vmem>>, vector<2x64x128xf32>
    tpu.vector_store %arg4[%c0_9, %c0_10, %c0_11], %22 {strides = array<i32>} : memref<2x64x128xf32, #tpu.memory_space<vmem>>, vector<2x64x128xf32>,
    return
  }
  func.func @transform_0(%arg0: i32) -> (i32, i32, i32) {
    %c0_i32 = arith.constant 0 : i32
    %c0_i32_0 = arith.constant 0 : i32
    %c0_i32_1 = arith.constant 0 : i32
    return %arg0, %c0_i32, %c0_i32_0 : i32, i32, i32
  }
  func.func @transform_1(%arg0: i32) -> (i32, i32) {
    %c0_i32 = arith.constant 0 : i32
    %c0_i32_0 = arith.constant 0 : i32
    %c0_i32_1 = arith.constant 0 : i32
    return %c0_i32, %c0_i32_0 : i32, i32
  }
  func.func @transform_2(%arg0: i32) -> (i32, i32) {
    %c0_i32 = arith.constant 0 : i32
    %c0_i32_0 = arith.constant 0 : i32
    %c0_i32_1 = arith.constant 0 : i32
    return %c0_i32, %c0_i32_0 : i32, i32
  }
  func.func @transform_3(%arg0: i32) -> (i32, i32, i32) {
    %c0_i32 = arith.constant 0 : i32
    %c0_i32_0 = arith.constant 0 : i32
    %c0_i32_1 = arith.constant 0 : i32
    return %arg0, %c0_i32, %c0_i32_0 : i32, i32, i32
  }
}

</mosaic_0001>

<llo_original>
// kernel: tpu_custom_call.1
$region0: #{tpu_custom_call.1}
  #allocation0 [shape = 'u32[]', space=smem, size = 0x4, offset = 0x4, fixed_abs, tag = 'smem constant byte address 0x4 - core index']
  #allocation1 [shape = 'u32[144,128]{1,0:T(1,128)}', space=vmem, size = 0x12000, scoped, tag = 'internal scratch']
  %s0 = inlined_call_operand.hbm [shape: f32[4,64,128], index: 0, kind: input, shape index: {}]
  %s1 = inlined_call_operand.hbm [shape: f32[128,128], index: 1, kind: input, shape index: {}]
  %s2 = inlined_call_operand.hbm [shape: f32[128,128], index: 2, kind: input, shape index: {}]
  %s3 = inlined_call_operand.hbm [shape: f32[4,64,128], index: 3, kind: output, shape index: {}]
  %s4 = sld [smem:[#allocation0]]
  $region57: #{tpu_custom_call.1} parent=0
    _
  %s6 = ssub.s32 1, %s4
  %s7 = scalar_select 0, %s6, %s4
  $region1: #{tpu_custom_call.1} parent=0
    #allocation2 [shape = 'u8[131072]{0}', space=vmem, size = 0x20000, scoped, tag = 'input window, operand 0']
    #allocation3 [shape = 's32[2]{0}', space=sflag, size = 0x8, scoped, tag = 'scoped memory for tpu_custom_call.1']
    #allocation4 [shape = 's32[2]{0}', space=sflag, size = 0x8, scoped, tag = 'scoped memory for tpu_custom_call.1']
    #allocation5 [shape = 'u8[65536]{0}', space=vmem, size = 0x10000, scoped, tag = 'input window, operand 1, single buffered']
    #allocation6 [shape = 's32[1]{0}', space=sflag, size = 0x4, scoped, tag = 'scoped memory for tpu_custom_call.1']
    #allocation7 [shape = 'u8[65536]{0}', space=vmem, size = 0x10000, scoped, tag = 'input window, operand 2, single buffered']
    #allocation8 [shape = 'u8[131072]{0}', space=vmem, size = 0x20000, scoped, tag = 'output window, operand 0']
    %8 = vsyncpa [#allocation3], 0
    %s9 = scalar_lea.sflag [#allocation3], 1
    %10 = vsyncpa %s9, 0
    %11 = vsyncpa [#allocation6], 0
    %12 = vsyncpa [#allocation4], 0
    %s13 = scalar_lea.sflag [#allocation4], 1
    %14 = vsyncpa %s13, 0
    loop: start=0, step=1, limit=4
    $region2: #{tpu_custom_call.1} parent=1 // loop_pre_header
      _
    $region3: #{tpu_custom_call.1} parent=1 // loop_header
      %s16 = sphi 0, %s20
      %p17 = scmp.ge.s32.totalorder %s16, 4
      %s26 = sphi 0, %s28
      %s29 = sphi 0, %s26
      %s30 = sphi 0, %s29
      %s46 = sphi 0, %s30
      %s50 = sphi 0, %s50
      %s52 = sphi 0, %s50
      %s53 = sphi 0, %s52
      %s67 = sphi 0, %s53
      %s71 = sphi 0, %s71
      %s73 = sphi 0, %s71
      %s74 = sphi 0, %s73
      %s88 = sphi 0, %s74
      %s94 = sphi 0, %s96
      %s97 = sphi 0, %s94
      %s98 = sphi 0, %s97
      %s114 = sphi 0, %s98
    $region4: #{tpu_custom_call.1} parent=1 // loop_header_branch
      %19 = sbr.rel (%p17) target = $region8
    $region5: #{tpu_custom_call.1} parent=1 // loop_body
      %s21 = ssub.s32 %s16, 1
      %s22 = ssub.s32 %s16, 2
      %s23 = sadd.s32 %s16, 1
      %s24 = ssub.s32 %s16, %s23
      %p25 = scmp.eq.s32.totalorder %s24, 0
      %s27 = sadd.s32 %s26, 1
      %s28 = scalar_select %p25, %s26, %s27
      %p31 = pneg %p25
      %p32 = scmp.eq.s32.totalorder %s16, 1
      %p33 = por %p31, %p32
      %p34 = scmp.ne.s32.totalorder %s26, %s29
      %p35 = scmp.eq.s32.totalorder %s16, 0
      %p36 = por %p34, %p35
      %p37 = scmp.ne.s32.totalorder %s26, %s29
      %p38 = scmp.eq.s32.totalorder %s21, 1
      %p39 = por %p37, %p38
      %p40 = scmp.ne.s32.totalorder %s29, %s30
      %p41 = scmp.eq.s32.totalorder %s21, 0
      %p42 = por %p40, %p41
      %p43 = scmp.ne.s32.totalorder %s29, %s30
      %p44 = scmp.eq.s32.totalorder %s22, 1
      %p45 = por %p43, %p44
      %p47 = scmp.ne.s32.totalorder %s30, %s46
      %p48 = scmp.eq.s32.totalorder %s22, 0
      %p49 = por %p47, %p48
      %s51 = sadd.s32 %s50, 1
      %p54 = scmp.eq.s32.totalorder %s16, 1
      %p55 = scmp.ne.s32.totalorder %s50, %s52
      %p56 = scmp.eq.s32.totalorder %s16, 0
      %p57 = por %p55, %p56
      %p58 = scmp.ne.s32.totalorder %s50, %s52
      %p59 = scmp.eq.s32.totalorder %s21, 1
      %p60 = por %p58, %p59
      %p61 = scmp.ne.s32.totalorder %s52, %s53
      %p62 = scmp.eq.s32.totalorder %s21, 0
      %p63 = por %p61, %p62
      %p64 = scmp.ne.s32.totalorder %s52, %s53
      %p65 = scmp.eq.s32.totalorder %s22, 1
      %p66 = por %p64, %p65
      %p68 = scmp.ne.s32.totalorder %s53, %s67
      %p69 = scmp.eq.s32.totalorder %s22, 0
      %p70 = por %p68, %p69
      %s72 = sadd.s32 %s71, 1
      %p75 = scmp.eq.s32.totalorder %s16, 1
      %p76 = scmp.ne.s32.totalorder %s71, %s73
      %p77 = scmp.eq.s32.totalorder %s16, 0
      %p78 = por %p76, %p77
      %p79 = scmp.ne.s32.totalorder %s71, %s73
      %p80 = scmp.eq.s32.totalorder %s21, 1
      %p81 = por %p79, %p80
      %p82 = scmp.ne.s32.totalorder %s73, %s74
      %p83 = scmp.eq.s32.totalorder %s21, 0
      %p84 = por %p82, %p83
      %p85 = scmp.ne.s32.totalorder %s73, %s74
      %p86 = scmp.eq.s32.totalorder %s22, 1
      %p87 = por %p85, %p86
      %p89 = scmp.ne.s32.totalorder %s74, %s88
      %p90 = scmp.eq.s32.totalorder %s22, 0
      %p91 = por %p89, %p90
      %s92 = ssub.s32 %s16, %s23
      %p93 = scmp.eq.s32.totalorder %s92, 0
      %s95 = sadd.s32 %s94, 1
      %s96 = scalar_select %p93, %s94, %s95
      %p99 = pneg %p93
      %p100 = scmp.eq.s32.totalorder %s16, 1
      %p101 = por %p99, %p100
      %p102 = scmp.ne.s32.totalorder %s94, %s97
      %p103 = scmp.eq.s32.totalorder %s16, 0
      %p104 = por %p102, %p103
      %p105 = scmp.ne.s32.totalorder %s94, %s97
      %p106 = scmp.eq.s32.totalorder %s21, 1
      %p107 = por %p105, %p106
      %p108 = scmp.ne.s32.totalorder %s97, %s98
      %p109 = scmp.eq.s32.totalorder %s21, 0
      %p110 = por %p108, %p109
      %p111 = scmp.ne.s32.totalorder %s97, %s98
      %p112 = scmp.eq.s32.totalorder %s22, 1
      %p113 = por %p111, %p112
      %p115 = scmp.ne.s32.totalorder %s98, %s114
      %p116 = scmp.eq.s32.totalorder %s22, 0
      %p117 = por %p115, %p116
      %p118 = scmp.le.s32.totalorder 1, %s16
      %p119 = scmp.lt.s32.totalorder %s16, 3
      %p120 = pnand %p118, %p119
      %p121 = pneg %p120
      // Predicated region
      $region9: #{tpu_custom_call.1} parent=5 // pred_check
        _
      $region10: #{tpu_custom_call.1} parent=5 // pred_check_branch
        %123 = sbr.rel (%p120) target = $region12
      $region11: #{tpu_custom_call.1} parent=5 // pred_region
        %s124 = ssub.s32 %s16, 1
        // Predicated region
        $region13: #{tpu_custom_call.1} parent=11 // pred_check
          %p125 = pneg %p63
        $region14: #{tpu_custom_call.1} parent=11 // pred_check_branch
          %127 = sbr.rel (%p125) target = $region16
        $region15: #{tpu_custom_call.1} parent=11 // pred_region
          %s129 = ssub.s32 2048, 2048
          %130 = vsyncadd [#allocation6], %s129
          %s131 = sshll.u32 [#allocation5], 4
          %s132 = int_to_ptr.vmem [resolvable:$true] %s131
          %137 = dma.hbm_to_vmem [thread:$0]  %s1, 2048, %s132, [#allocation6], 128, 128, 8
        $region16: #{tpu_custom_call.1} parent=11 // pred_fallthru
          _
        // Predicated region
        $region17: #{tpu_custom_call.1} parent=11 // pred_check
          %p138 = pneg %p84
        $region18: #{tpu_custom_call.1} parent=11 // pred_check_branch
          %140 = sbr.rel (%p138) target = $region20
        $region19: #{tpu_custom_call.1} parent=11 // pred_region
          %s142 = ssub.s32 2048, 2048
          %143 = vsyncadd [#allocation6], %s142
          %s144 = sshll.u32 [#allocation7], 4
          %s145 = int_to_ptr.vmem [resolvable:$true] %s144
          %150 = dma.hbm_to_vmem [thread:$0]  %s2, 2048, %s145, [#allocation6], 128, 128, 8
        $region20: #{tpu_custom_call.1} parent=11 // pred_fallthru
          _
      $region12: #{tpu_custom_call.1} parent=5 // pred_fallthru
        _
      %p151 = scmp.lt.s32.totalorder %s16, 2
      // Predicated region
      $region21: #{tpu_custom_call.1} parent=5 // pred_check
        %p152 = pneg %p151
      $region22: #{tpu_custom_call.1} parent=5 // pred_check_branch
        %154 = sbr.rel (%p152) target = $region24
      $region23: #{tpu_custom_call.1} parent=5 // pred_region
        // Predicated region
        $region25: #{tpu_custom_call.1} parent=23 // pred_check
          %p155 = pneg %p36
        $region26: #{tpu_custom_call.1} parent=23 // pred_check_branch
          %157 = sbr.rel (%p155) target = $region28
        $region27: #{tpu_custom_call.1} parent=23 // pred_region
          %s158 = sand.u32 %s26, 1
          %s159 = scalar_lea.sflag [#allocation3], %s158
          %s160 = sand.u32 %s26, 1
          %s161 = smul.addr %s160, 128
          %s162 = scalar_lea.vmem [#allocation2], %s161
          %s163 = smul.u32 2, %s16
          %s165 = ssub.s32 2048, 2048
          %166 = vsyncadd %s159, %s165
          %s167 = smul.addr %s163, 8
          %s168 = smul.addr %s167, 128
          %s169 = scalar_lea.hbm %s0, %s168
          %s170 = sshll.u32 %s162, 4
          %s171 = int_to_ptr.vmem [resolvable:$true] %s170
          %176 = dma.hbm_to_vmem [thread:$0]  %s169, 2048, %s171, %s159, 128, 128, 8
        $region28: #{tpu_custom_call.1} parent=23 // pred_fallthru
          _
      $region24: #{tpu_custom_call.1} parent=5 // pred_fallthru
        _
      %p177 = scmp.le.s32.totalorder 1, %s16
      %p178 = scmp.lt.s32.totalorder %s16, 3
      %p179 = pnand %p177, %p178
      %p180 = pneg %p179
      // Predicated region
      $region29: #{tpu_custom_call.1} parent=5 // pred_check
        _
      $region30: #{tpu_custom_call.1} parent=5 // pred_check_branch
        %182 = sbr.rel (%p179) target = $region32
      $region31: #{tpu_custom_call.1} parent=5 // pred_region
        %s183 = ssub.s32 %s16, 1
        %s184 = sand.u32 %s29, 1
        %s185 = scalar_lea.sflag [#allocation3], %s184
        %s186 = sand.u32 %s29, 1
        %s187 = smul.addr %s186, 128
        %s188 = scalar_lea.vmem [#allocation2], %s187
        // Predicated region
        $region33: #{tpu_custom_call.1} parent=31 // pred_check
          %p189 = pneg %p42
        $region34: #{tpu_custom_call.1} parent=31 // pred_check_branch
          %191 = sbr.rel (%p189) target = $region36
        $region35: #{tpu_custom_call.1} parent=31 // pred_region
          %192 = dma.done %s185, 2048
        $region36: #{tpu_custom_call.1} parent=31 // pred_fallthru
          _
        // Predicated region
        $region37: #{tpu_custom_call.1} parent=31 // pred_check
          %p193 = pneg %p63
        $region38: #{tpu_custom_call.1} parent=31 // pred_check_branch
          %195 = sbr.rel (%p193) target = $region40
        $region39: #{tpu_custom_call.1} parent=31 // pred_region
          %196 = dma.done [#allocation6], 2048
        $region40: #{tpu_custom_call.1} parent=31 // pred_fallthru
          _
        // Predicated region
        $region41: #{tpu_custom_call.1} parent=31 // pred_check
          %p197 = pneg %p84
        $region42: #{tpu_custom_call.1} parent=31 // pred_check_branch
          %199 = sbr.rel (%p197) target = $region44
        $region43: #{tpu_custom_call.1} parent=31 // pred_region
          %200 = dma.done [#allocation6], 2048
        $region44: #{tpu_custom_call.1} parent=31 // pred_fallthru
          _
        %s201 = sand.u32 %s29, 1
        %s202 = scalar_lea.sflag [#allocation3], %s201
        %s203 = sand.u32 %s29, 1
        %s204 = smul.addr %s203, 128
        %s205 = scalar_lea.vmem [#allocation2], %s204
        %p206 = pneg %p42
        %p207 = pneg %p39
        %p208 = pneg %p63
        %p209 = pneg %p60
        %p210 = pneg %p84
        %p211 = pneg %p81
        %p212 = pneg %p110
        %p213 = pneg %p107
        %s214 = sand.u32 %s97, 1
        %s215 = scalar_lea.sflag [#allocation4], %s214
        %s216 = sand.u32 %s97, 1
        %s217 = smul.addr %s216, 128
        %s218 = scalar_lea.vmem [#allocation8], %s217
        %s219 = smul.u32 2, %s21
        %s220 = smul.u32 2, %s21
        %v222 = vld [vmem:[%s188] sm:$0xff]
        %v223 = vld [vmem:[%s188 + $0x8] sm:$0xff]
        %v224 = vld [vmem:[%s188 + $0x10] sm:$0xff]
        %v225 = vld [vmem:[%s188 + $0x18] sm:$0xff]
        %v226 = vld [vmem:[%s188 + $0x20] sm:$0xff]
        %v227 = vld [vmem:[%s188 + $0x28] sm:$0xff]
        %v228 = vld [vmem:[%s188 + $0x30] sm:$0xff]
        %v229 = vld [vmem:[%s188 + $0x38] sm:$0xff]
        %v230 = vld [vmem:[%s188 + $0x40] sm:$0xff]
        %v231 = vld [vmem:[%s188 + $0x48] sm:$0xff]
        %v232 = vld [vmem:[%s188 + $0x50] sm:$0xff]
        %v233 = vld [vmem:[%s188 + $0x58] sm:$0xff]
        %v234 = vld [vmem:[%s188 + $0x60] sm:$0xff]
        %v235 = vld [vmem:[%s188 + $0x68] sm:$0xff]
        %v236 = vld [vmem:[%s188 + $0x70] sm:$0xff]
        %v237 = vld [vmem:[%s188 + $0x78] sm:$0xff]
        %v238 = vpack.c.bf16 %v223, %v222
        %v239 = vpack.c.bf16 %v225, %v224
        %v240 = vpack.c.bf16 %v227, %v226
        %v241 = vpack.c.bf16 %v229, %v228
        %v242 = vpack.c.bf16 %v231, %v230
        %v243 = vpack.c.bf16 %v233, %v232
        %v244 = vpack.c.bf16 %v235, %v234
        %v245 = vpack.c.bf16 %v237, %v236
        %v246 = vld [vmem:[#allocation5] sm:$0xff]
        %v247 = vld [vmem:[#allocation5 + $0x8] sm:$0xff]
        %v248 = vld [vmem:[#allocation5 + $0x10] sm:$0xff]
        %v249 = vld [vmem:[#allocation5 + $0x18] sm:$0xff]
        %v250 = vld [vmem:[#allocation5 + $0x20] sm:$0xff]
        %v251 = vld [vmem:[#allocation5 + $0x28] sm:$0xff]
        %v252 = vld [vmem:[#allocation5 + $0x30] sm:$0xff]
        %v253 = vld [vmem:[#allocation5 + $0x38] sm:$0xff]
        %v254 = vld [vmem:[#allocation5 + $0x40] sm:$0xff]
        %v255 = vld [vmem:[#allocation5 + $0x48] sm:$0xff]
        %v256 = vld [vmem:[#allocation5 + $0x50] sm:$0xff]
        %v257 = vld [vmem:[#allocation5 + $0x58] sm:$0xff]
        %v258 = vld [vmem:[#allocation5 + $0x60] sm:$0xff]
        %v259 = vld [vmem:[#allocation5 + $0x68] sm:$0xff]
        %v260 = vld [vmem:[#allocation5 + $0x70] sm:$0xff]
        %v261 = vld [vmem:[#allocation5 + $0x78] sm:$0xff]
        %v262 = vpack.c.bf16 %v247, %v246
        %v263 = vpack.c.bf16 %v249, %v248
        %v264 = vpack.c.bf16 %v251, %v250
        %v265 = vpack.c.bf16 %v253, %v252
        %v266 = vpack.c.bf16 %v255, %v254
        %v267 = vpack.c.bf16 %v257, %v256
        %v268 = vpack.c.bf16 %v259, %v258
        %v269 = vpack.c.bf16 %v261, %v260
        %270 = vmatprep.subr.bf16.mxu0 0
        %271 = vmatpush1.bf16.msra.mxu0 %v262
        %272 = vmatprep.subr.bf16.mxu0 0
        %273 = vmatpush1.bf16.msra.mxu0 %v263
        %274 = vmatprep.subr.bf16.mxu0 0
        %275 = vmatpush1.bf16.msra.mxu0 %v264
        %276 = vmatprep.subr.bf16.mxu0 0
        %277 = vmatpush1.bf16.msra.mxu0 %v265
        %278 = vmatprep.subr.bf16.mxu0 0
        %279 = vmatpush1.bf16.msra.mxu0 %v266
        %280 = vmatprep.subr.bf16.mxu0 0
        %281 = vmatpush1.bf16.msra.mxu0 %v267
        %282 = vmatprep.subr.bf16.mxu0 0
        %283 = vmatpush1.bf16.msra.mxu0 %v268
        %284 = vmatprep.subr.bf16.mxu0 0
        %285 = vmatpush1.bf16.msra.mxu0 %v269
        %286 = vmatprep.subr.bf16.mxu0 0
        %287 = vmatpush1.bf16.msra.mxu0 0
        %288 = vmatprep.subr.bf16.mxu0 0
        %289 = vmatpush1.bf16.msra.mxu0 0
        %290 = vmatprep.subr.bf16.mxu0 0
        %291 = vmatpush1.bf16.msra.mxu0 0
        %292 = vmatprep.subr.bf16.mxu0 0
        %293 = vmatpush1.bf16.msra.mxu0 0
        %294 = vmatprep.subr.bf16.mxu0 0
        %295 = vmatpush1.bf16.msra.mxu0 0
        %296 = vmatprep.subr.bf16.mxu0 0
        %297 = vmatpush1.bf16.msra.mxu0 0
        %298 = vmatprep.subr.bf16.mxu0 0
        %299 = vmatpush1.bf16.msra.mxu0 0
        %300 = vmatprep.subr.bf16.mxu0 0
        %301 = vmatpush1.bf16.msra.mxu0 0
        %302 = vmatprep.mubr.bf16.mxu0 0
        %303 = vmatmul.mubr.bf16.gmra.mrb[0].mxu0 %v238
        %v304 = vpop.f32.mrb[0].mxu0
        %v305 = vadd.f32 0.0, %v304
        %v306 = vpop.f32.mrb[0].mxu0
        %v307 = vpop.f32.mrb[0].mxu0
        %v308 = vadd.f32 0.0, %v307
        %v309 = vpop.f32.mrb[0].mxu0
        %310 = vmatprep.mubr.bf16.mxu0 0
        %311 = vmatmul.mubr.bf16.gmra.mrb[0].mxu0 %v239
        %v312 = vpop.f32.mrb[0].mxu0
        %v313 = vadd.f32 0.0, %v312
        %v314 = vpop.f32.mrb[0].mxu0
        %v315 = vpop.f32.mrb[0].mxu0
        %v316 = vadd.f32 0.0, %v315
        %v317 = vpop.f32.mrb[0].mxu0
        %318 = vmatprep.mubr.bf16.mxu0 0
        %319 = vmatmul.mubr.bf16.gmra.mrb[0].mxu0 %v240
        %v320 = vpop.f32.mrb[0].mxu0
        %v321 = vadd.f32 0.0, %v320
        %v322 = vpop.f32.mrb[0].mxu0
        %v323 = vpop.f32.mrb[0].mxu0
        %v324 = vadd.f32 0.0, %v323
        %v325 = vpop.f32.mrb[0].mxu0
        %326 = vmatprep.mubr.bf16.mxu0 0
        %327 = vmatmul.mubr.bf16.gmra.mrb[0].mxu0 %v241
        %v328 = vpop.f32.mrb[0].mxu0
        %v329 = vadd.f32 0.0, %v328
        %v330 = vpop.f32.mrb[0].mxu0
        %v331 = vpop.f32.mrb[0].mxu0
        %v332 = vadd.f32 0.0, %v331
        %v333 = vpop.f32.mrb[0].mxu0
        %334 = vmatprep.mubr.bf16.mxu0 0
        %335 = vmatmul.mubr.bf16.gmra.mrb[0].mxu0 %v242
        %v336 = vpop.f32.mrb[0].mxu0
        %v337 = vadd.f32 0.0, %v336
        %v338 = vpop.f32.mrb[0].mxu0
        %v339 = vpop.f32.mrb[0].mxu0
        %v340 = vadd.f32 0.0, %v339
        %v341 = vpop.f32.mrb[0].mxu0
        %342 = vmatprep.mubr.bf16.mxu0 0
        %343 = vmatmul.mubr.bf16.gmra.mrb[0].mxu0 %v243
        %v344 = vpop.f32.mrb[0].mxu0
        %v345 = vadd.f32 0.0, %v344
        %v346 = vpop.f32.mrb[0].mxu0
        %v347 = vpop.f32.mrb[0].mxu0
        %v348 = vadd.f32 0.0, %v347
        %v349 = vpop.f32.mrb[0].mxu0
        %350 = vmatprep.mubr.bf16.mxu0 0
        %351 = vmatmul.mubr.bf16.gmra.mrb[0].mxu0 %v244
        %v352 = vpop.f32.mrb[0].mxu0
        %v353 = vadd.f32 0.0, %v352
        %v354 = vpop.f32.mrb[0].mxu0
        %v355 = vpop.f32.mrb[0].mxu0
        %v356 = vadd.f32 0.0, %v355
        %v357 = vpop.f32.mrb[0].mxu0
        %358 = vmatprep.mubr.bf16.mxu0 0
        %359 = vmatmul.mubr.bf16.gmra.mrb[0].mxu0 %v245
        %v360 = vpop.f32.mrb[0].mxu0
        %v361 = vadd.f32 0.0, %v360
        %v362 = vpop.f32.mrb[0].mxu0
        %v363 = vpop.f32.mrb[0].mxu0
        %v364 = vadd.f32 0.0, %v363
        %v365 = vpop.f32.mrb[0].mxu0
        %366 = vdwg.mxu0
        %v367 = vmax.f32 %v305, %v313
        %v368 = vmax.f32 %v308, %v316
        %v369 = vmax.f32 %v367, %v321
        %v370 = vmax.f32 %v368, %v324
        %v371 = vmax.f32 %v369, %v329
        %v372 = vmax.f32 %v370, %v332
        %v373 = vmax.f32 %v371, %v372
        %v374 = vrot.slane %v373, 4
        %v375 = vmax.f32 %v373, %v374
        %v376 = vrot.slane %v375, 2
        %v377 = vmax.f32 %v375, %v376
        %v378 = vrot.slane %v377, 1
        %v379 = vmax.f32 %v377, %v378
        %v380 = vmax.f32 %v337, %v345
        %v381 = vmax.f32 %v340, %v348
        %v382 = vmax.f32 %v380, %v353
        %v383 = vmax.f32 %v381, %v356
        %v384 = vmax.f32 %v382, %v361
        %v385 = vmax.f32 %v383, %v364
        %v386 = vmax.f32 %v384, %v385
        %v387 = vrot.slane %v386, 4
        %v388 = vmax.f32 %v386, %v387
        %v389 = vrot.slane %v388, 2
        %v390 = vmax.f32 %v388, %v389
        %v391 = vrot.slane %v390, 1
        %v392 = vmax.f32 %v390, %v391
        %v393 = vsub.f32 %v305, %v379
        %v394 = vsub.f32 %v308, %v379
        %v395 = vsub.f32 %v313, %v379
        %v396 = vsub.f32 %v316, %v379
        %v397 = vsub.f32 %v321, %v379
        %v398 = vsub.f32 %v324, %v379
        %v399 = vsub.f32 %v329, %v379
        %v400 = vsub.f32 %v332, %v379
        %v401 = vsub.f32 %v337, %v392
        %v402 = vsub.f32 %v340, %v392
        %v403 = vsub.f32 %v345, %v392
        %v404 = vsub.f32 %v348, %v392
        %v405 = vsub.f32 %v353, %v392
        %v406 = vsub.f32 %v356, %v392
        %v407 = vsub.f32 %v361, %v392
        %v408 = vsub.f32 %v364, %v392
        %v409 = vmul.f32 %v393, 1.442695
        %v410 = vpow.pop %v409
        %v411 = vmul.f32 %v394, 1.442695
        %v412 = vpow.pop %v411
        %v413 = vmul.f32 %v395, 1.442695
        %v414 = vpow.pop %v413
        %v415 = vmul.f32 %v396, 1.442695
        %v416 = vpow.pop %v415
        %v417 = vmul.f32 %v397, 1.442695
        %v418 = vpow.pop %v417
        %v419 = vmul.f32 %v398, 1.442695
        %v420 = vpow.pop %v419
        %v421 = vmul.f32 %v399, 1.442695
        %v422 = vpow.pop %v421
        %v423 = vmul.f32 %v400, 1.442695
        %v424 = vpow.pop %v423
        %v425 = vmul.f32 %v401, 1.442695
        %v426 = vpow.pop %v425
        %v427 = vmul.f32 %v402, 1.442695
        %v428 = vpow.pop %v427
        %v429 = vmul.f32 %v403, 1.442695
        %v430 = vpow.pop %v429
        %v431 = vmul.f32 %v404, 1.442695
        %v432 = vpow.pop %v431
        %v433 = vmul.f32 %v405, 1.442695
        %v434 = vpow.pop %v433
        %v435 = vmul.f32 %v406, 1.442695
        %v436 = vpow.pop %v435
        %v437 = vmul.f32 %v407, 1.442695
        %v438 = vpow.pop %v437
        %v439 = vmul.f32 %v408, 1.442695
        %v440 = vpow.pop %v439
        %v441 = vadd.f32 %v410, %v412
        %v442 = vadd.f32 %v441, %v414
        %v443 = vadd.f32 %v442, %v416
        %v444 = vadd.f32 %v443, %v418
        %v445 = vadd.f32 %v444, %v420
        %v446 = vadd.f32 %v445, %v422
        %v447 = vadd.f32 %v446, %v424
        %v448 = vrot.slane %v447, 4
        %v449 = vadd.f32 %v447, %v448
        %v450 = vrot.slane %v449, 2
        %v451 = vadd.f32 %v449, %v450
        %v452 = vrot.slane %v451, 1
        %v453 = vadd.f32 %v451, %v452
        %v454 = vadd.f32 %v426, %v428
        %v455 = vadd.f32 %v454, %v430
        %v456 = vadd.f32 %v455, %v432
        %v457 = vadd.f32 %v456, %v434
        %v458 = vadd.f32 %v457, %v436
        %v459 = vadd.f32 %v458, %v438
        %v460 = vadd.f32 %v459, %v440
        %v461 = vrot.slane %v460, 4
        %v462 = vadd.f32 %v460, %v461
        %v463 = vrot.slane %v462, 2
        %v464 = vadd.f32 %v462, %v463
        %v465 = vrot.slane %v464, 1
        %v466 = vadd.f32 %v464, %v465
        %v467 = vrcp.pop %v453
        %v468 = vrcp.pop %v466
        %v469 = vmul.f32 %v410, %v467
        %v470 = vmul.f32 %v412, %v467
        %v471 = vmul.f32 %v414, %v467
        %v472 = vmul.f32 %v416, %v467
        %v473 = vmul.f32 %v418, %v467
        %v474 = vmul.f32 %v420, %v467
        %v475 = vmul.f32 %v422, %v467
        %v476 = vmul.f32 %v424, %v467
        %v477 = vmul.f32 %v426, %v468
        %v478 = vmul.f32 %v428, %v468
        %v479 = vmul.f32 %v430, %v468
        %v480 = vmul.f32 %v432, %v468
        %v481 = vmul.f32 %v434, %v468
        %v482 = vmul.f32 %v436, %v468
        %v483 = vmul.f32 %v438, %v468
        %v484 = vmul.f32 %v440, %v468
        %v485 = vpack.c.bf16 %v470, %v469
        %v486 = vpack.c.bf16 %v472, %v471
        %v487 = vpack.c.bf16 %v474, %v473
        %v488 = vpack.c.bf16 %v476, %v475
        %v489 = vpack.c.bf16 %v478, %v477
        %v490 = vpack.c.bf16 %v480, %v479
        %v491 = vpack.c.bf16 %v482, %v481
        %v492 = vpack.c.bf16 %v484, %v483
        %v493 = vld [vmem:[#allocation7] sm:$0xff]
        %v494 = vld [vmem:[#allocation7 + $0x8] sm:$0xff]
        %v495 = vld [vmem:[#allocation7 + $0x10] sm:$0xff]
        %v496 = vld [vmem:[#allocation7 + $0x18] sm:$0xff]
        %v497 = vld [vmem:[#allocation7 + $0x20] sm:$0xff]
        %v498 = vld [vmem:[#allocation7 + $0x28] sm:$0xff]
        %v499 = vld [vmem:[#allocation7 + $0x30] sm:$0xff]
        %v500 = vld [vmem:[#allocation7 + $0x38] sm:$0xff]
        %v501 = vld [vmem:[#allocation7 + $0x40] sm:$0xff]
        %v502 = vld [vmem:[#allocation7 + $0x48] sm:$0xff]
        %v503 = vld [vmem:[#allocation7 + $0x50] sm:$0xff]
        %v504 = vld [vmem:[#allocation7 + $0x58] sm:$0xff]
        %v505 = vld [vmem:[#allocation7 + $0x60] sm:$0xff]
        %v506 = vld [vmem:[#allocation7 + $0x68] sm:$0xff]
        %v507 = vld [vmem:[#allocation7 + $0x70] sm:$0xff]
        %v508 = vld [vmem:[#allocation7 + $0x78] sm:$0xff]
        %v509 = vpack.c.bf16 %v494, %v493
        %v510 = vpack.c.bf16 %v496, %v495
        %v511 = vpack.c.bf16 %v498, %v497
        %v512 = vpack.c.bf16 %v500, %v499
        %v513 = vpack.c.bf16 %v502, %v501
        %v514 = vpack.c.bf16 %v504, %v503
        %v515 = vpack.c.bf16 %v506, %v505
        %v516 = vpack.c.bf16 %v508, %v507
        %517 = vmatprep.subr.bf16.mxu0 0
        %518 = vmatpush1.bf16.msra.mxu0 %v509
        %519 = vmatprep.subr.bf16.mxu0 0
        %520 = vmatpush1.bf16.msra.mxu0 %v510
        %521 = vmatprep.subr.bf16.mxu0 0
        %522 = vmatpush1.bf16.msra.mxu0 %v511
        %523 = vmatprep.subr.bf16.mxu0 0
        %524 = vmatpush1.bf16.msra.mxu0 %v512
        %525 = vmatprep.subr.bf16.mxu0 0
        %526 = vmatpush1.bf16.msra.mxu0 %v513
        %527 = vmatprep.subr.bf16.mxu0 0
        %528 = vmatpush1.bf16.msra.mxu0 %v514
        %529 = vmatprep.subr.bf16.mxu0 0
        %530 = vmatpush1.bf16.msra.mxu0 %v515
        %531 = vmatprep.subr.bf16.mxu0 0
        %532 = vmatpush1.bf16.msra.mxu0 %v516
        %533 = vmatprep.subr.bf16.mxu0 0
        %534 = vmatpush1.bf16.msra.mxu0 0
        %535 = vmatprep.subr.bf16.mxu0 0
        %536 = vmatpush1.bf16.msra.mxu0 0
        %537 = vmatprep.subr.bf16.mxu0 0
        %538 = vmatpush1.bf16.msra.mxu0 0
        %539 = vmatprep.subr.bf16.mxu0 0
        %540 = vmatpush1.bf16.msra.mxu0 0
        %541 = vmatprep.subr.bf16.mxu0 0
        %542 = vmatpush1.bf16.msra.mxu0 0
        %543 = vmatprep.subr.bf16.mxu0 0
        %544 = vmatpush1.bf16.msra.mxu0 0
        %545 = vmatprep.subr.bf16.mxu0 0
        %546 = vmatpush1.bf16.msra.mxu0 0
        %547 = vmatprep.subr.bf16.mxu0 0
        %548 = vmatpush1.bf16.msra.mxu0 0
        %549 = vmatprep.mubr.bf16.mxu0 0
        %550 = vmatmul.mubr.bf16.gmra.mrb[0].mxu0 %v485
        %v551 = vpop.f32.mrb[0].mxu0
        %v552 = vadd.f32 0.0, %v551
        %v553 = vpop.f32.mrb[0].mxu0
        %v554 = vpop.f32.mrb[0].mxu0
        %v555 = vadd.f32 0.0, %v554
        %v556 = vpop.f32.mrb[0].mxu0
        %557 = vmatprep.mubr.bf16.mxu0 0
        %558 = vmatmul.mubr.bf16.gmra.mrb[0].mxu0 %v486
        %v559 = vpop.f32.mrb[0].mxu0
        %v560 = vadd.f32 0.0, %v559
        %v561 = vpop.f32.mrb[0].mxu0
        %v562 = vpop.f32.mrb[0].mxu0
        %v563 = vadd.f32 0.0, %v562
        %v564 = vpop.f32.mrb[0].mxu0
        %565 = vmatprep.mubr.bf16.mxu0 0
        %566 = vmatmul.mubr.bf16.gmra.mrb[0].mxu0 %v487
        %v567 = vpop.f32.mrb[0].mxu0
        %v568 = vadd.f32 0.0, %v567
        %v569 = vpop.f32.mrb[0].mxu0
        %v570 = vpop.f32.mrb[0].mxu0
        %v571 = vadd.f32 0.0, %v570
        %v572 = vpop.f32.mrb[0].mxu0
        %573 = vmatprep.mubr.bf16.mxu0 0
        %574 = vmatmul.mubr.bf16.gmra.mrb[0].mxu0 %v488
        %v575 = vpop.f32.mrb[0].mxu0
        %v576 = vadd.f32 0.0, %v575
        %v577 = vpop.f32.mrb[0].mxu0
        %v578 = vpop.f32.mrb[0].mxu0
        %v579 = vadd.f32 0.0, %v578
        %v580 = vpop.f32.mrb[0].mxu0
        %581 = vmatprep.mubr.bf16.mxu0 0
        %582 = vmatmul.mubr.bf16.gmra.mrb[0].mxu0 %v489
        %v583 = vpop.f32.mrb[0].mxu0
        %v584 = vadd.f32 0.0, %v583
        %v585 = vpop.f32.mrb[0].mxu0
        %v586 = vpop.f32.mrb[0].mxu0
        %v587 = vadd.f32 0.0, %v586
        %v588 = vpop.f32.mrb[0].mxu0
        %589 = vmatprep.mubr.bf16.mxu0 0
        %590 = vmatmul.mubr.bf16.gmra.mrb[0].mxu0 %v490
        %v591 = vpop.f32.mrb[0].mxu0
        %v592 = vadd.f32 0.0, %v591
        %v593 = vpop.f32.mrb[0].mxu0
        %v594 = vpop.f32.mrb[0].mxu0
        %v595 = vadd.f32 0.0, %v594
        %v596 = vpop.f32.mrb[0].mxu0
        %597 = vmatprep.mubr.bf16.mxu0 0
        %598 = vmatmul.mubr.bf16.gmra.mrb[0].mxu0 %v491
        %v599 = vpop.f32.mrb[0].mxu0
        %v600 = vadd.f32 0.0, %v599
        %v601 = vpop.f32.mrb[0].mxu0
        %v602 = vpop.f32.mrb[0].mxu0
        %v603 = vadd.f32 0.0, %v602
        %v604 = vpop.f32.mrb[0].mxu0
        %605 = vmatprep.mubr.bf16.mxu0 0
        %606 = vmatmul.mubr.bf16.gmra.mrb[0].mxu0 %v492
        %v607 = vpop.f32.mrb[0].mxu0
        %v608 = vadd.f32 0.0, %v607
        %v609 = vpop.f32.mrb[0].mxu0
        %v610 = vpop.f32.mrb[0].mxu0
        %v611 = vadd.f32 0.0, %v610
        %v612 = vpop.f32.mrb[0].mxu0
        %613 = vdwg.mxu0
        %614 = vst [vmem:[%s218] sm:$0xff] %v552
        %615 = vst [vmem:[%s218 + $0x8] sm:$0xff] %v555
        %616 = vst [vmem:[%s218 + $0x10] sm:$0xff] %v560
        %617 = vst [vmem:[%s218 + $0x18] sm:$0xff] %v563
        %618 = vst [vmem:[%s218 + $0x20] sm:$0xff] %v568
        %619 = vst [vmem:[%s218 + $0x28] sm:$0xff] %v571
        %620 = vst [vmem:[%s218 + $0x30] sm:$0xff] %v576
        %621 = vst [vmem:[%s218 + $0x38] sm:$0xff] %v579
        %622 = vst [vmem:[%s218 + $0x40] sm:$0xff] %v584
        %623 = vst [vmem:[%s218 + $0x48] sm:$0xff] %v587
        %624 = vst [vmem:[%s218 + $0x50] sm:$0xff] %v592
        %625 = vst [vmem:[%s218 + $0x58] sm:$0xff] %v595
        %626 = vst [vmem:[%s218 + $0x60] sm:$0xff] %v600
        %627 = vst [vmem:[%s218 + $0x68] sm:$0xff] %v603
        %628 = vst [vmem:[%s218 + $0x70] sm:$0xff] %v608
        %629 = vst [vmem:[%s218 + $0x78] sm:$0xff] %v611
        %s630 = sand.u32 %s97, 1
        %s631 = scalar_lea.sflag [#allocation4], %s630
        %s632 = sand.u32 %s97, 1
        %s633 = smul.addr %s632, 128
        %s634 = scalar_lea.vmem [#allocation8], %s633
        // Predicated region
        $region45: #{tpu_custom_call.1} parent=31 // pred_check
          %p635 = pneg %p107
        $region46: #{tpu_custom_call.1} parent=31 // pred_check_branch
          %637 = sbr.rel (%p635) target = $region48
        $region47: #{tpu_custom_call.1} parent=31 // pred_region
          %s638 = smul.u32 2, %s21
          %s640 = ssub.s32 2048, 2048
          %641 = vsyncadd %s631, %s640
          %s642 = smul.addr %s638, 8
          %s643 = smul.addr %s642, 128
          %s644 = scalar_lea.hbm %s3, %s643
          %s645 = sshll.u32 %s634, 4
          %s646 = int_to_ptr.vmem [resolvable:$true] %s645
          %651 = dma.vmem_to_hbm [thread:$0]  %s646, 2048, %s644, %s631, 128, 128, 8
        $region48: #{tpu_custom_call.1} parent=31 // pred_fallthru
          _
      $region32: #{tpu_custom_call.1} parent=5 // pred_fallthru
        _
      %p652 = scmp.le.s32.totalorder 2, %s16
      // Predicated region
      $region49: #{tpu_custom_call.1} parent=5 // pred_check
        %p653 = pneg %p652
      $region50: #{tpu_custom_call.1} parent=5 // pred_check_branch
        %655 = sbr.rel (%p653) target = $region52
      $region51: #{tpu_custom_call.1} parent=5 // pred_region
        %s656 = ssub.s32 %s16, 2
        // Predicated region
        $region53: #{tpu_custom_call.1} parent=51 // pred_check
          %p657 = pneg %p113
        $region54: #{tpu_custom_call.1} parent=51 // pred_check_branch
          %659 = sbr.rel (%p657) target = $region56
        $region55: #{tpu_custom_call.1} parent=51 // pred_region
          %s660 = sand.u32 %s98, 1
          %s661 = scalar_lea.sflag [#allocation4], %s660
          %s662 = sand.u32 %s98, 1
          %s663 = smul.addr %s662, 128
          %s664 = scalar_lea.vmem [#allocation8], %s663
          %665 = dma.done %s661, 2048
        $region56: #{tpu_custom_call.1} parent=51 // pred_fallthru
          _
      $region52: #{tpu_custom_call.1} parent=5 // pred_fallthru
        _
    $region6: #{tpu_custom_call.1} parent=1 // loop_footer
      %s20 = sadd.s32 1, %s16
    $region7: #{tpu_custom_call.1} parent=1 // loop_footer_branch
      %15 = sbr.rel target = $region3
    $region8: #{tpu_custom_call.1} parent=1 // loop_exit
      _
    %666 = vsyncpa [#allocation3], 1
    %s667 = scalar_lea.sflag [#allocation3], 1
    %668 = vsyncpa %s667, 1
    %669 = vsyncpa [#allocation6], 1
    %670 = vsyncpa [#allocation4], 1
    %s671 = scalar_lea.sflag [#allocation4], 1
    %672 = vsyncpa %s671, 1

</llo_original>
